<compile_context>
chip_gen: v6e
topology: v6e:2x2x1
jax: 0.10.0
libtpu: 0.0.40
codegen_flags: <defaults>
</compile_context>

<pallas_src>
import functools

import jax
import jax.numpy as jnp
from jax.experimental import pallas as pl
from jax.experimental.pallas import tpu as pltpu


def _round_up(v, m):
    return ((v + m - 1) // m) * m


def _moe_kernel(x_ref, wg_ref, w12_ref, b12_ref, wp_ref, bp_ref, out_ref, *,
                num_experts):
    """One token tile: top-2 sparse softmax gate + expert-0 SwiGLU, packed output.

    Output slab layout per token row (f32):
      lanes [0, EP)      : gated probs (EP = round_up(E, 8); padded lanes are 0)
      lanes [EP, EP + C) : expert-0 SwiGLU output, zeroed for non-routed tokens
    """
    x = x_ref[...]                                        # (TM, C) bf16, MXU operand

    # -------- gate: logits over EP padded lanes, top-2, first-index tie-break -----
    logits = jnp.dot(x, wg_ref[...], preferred_element_type=jnp.float32)  # (TM, EP)
    tm, ep = logits.shape
    col = jax.lax.broadcasted_iota(jnp.int32, (tm, ep), 1)
    logits = jnp.where(col < num_experts, logits, -jnp.inf)   # mask padded lanes

    m1 = jnp.max(logits, axis=-1, keepdims=True)
    idx1 = jnp.min(jnp.where(logits == m1, col, ep), axis=-1, keepdims=True)
    masked = jnp.where(col == idx1, -jnp.inf, logits)
    m2 = jnp.max(masked, axis=-1, keepdims=True)
    idx2 = jnp.min(jnp.where(masked == m2, col, ep), axis=-1, keepdims=True)

    top_mask = (col == idx1) | (col == idx2)
    num = jnp.where(top_mask, jnp.exp(logits - m1), 0.0)
    # Exact divide so gated probs sum to exactly 1 (one divide per row, negligible).
    probs = num / jnp.sum(num, axis=-1, keepdims=True)         # (TM, EP) f32

    # -------- expert 0: fused SwiGLU, dense per tile, non-routed rows zeroed ------
    # TODO(synk): the reference gathers rows with a boolean mask (data-dependent
    # shape); here expert 0 is computed densely per tile and masked instead.
    sel = ((idx1 == 0) | (idx2 == 0)).astype(jnp.float32)       # (TM, 1)
    h12 = jnp.dot(x, w12_ref[...],
                  preferred_element_type=jnp.float32) + b12_ref[...]   # (TM, 2H) f32
    hdim = h12.shape[-1] // 2
    h1 = h12[:, :hdim]
    h2 = h12[:, hdim:]
    # Single-transcendental sigmoid (tanh form): halves EUP load, no exp overflow.
    sig = 0.5 * jnp.tanh(0.5 * h2) + 0.5
    h = h1 * (h2 * sig)                                          # ln_1 * SiLU(ln_2)
    y = jnp.dot(h.astype(jnp.bfloat16), wp_ref[...],
                preferred_element_type=jnp.float32) + bp_ref[...]      # (TM, C) f32

    # -------- single full-slab store: probs | masked expert-0 output --------------
    out_ref[...] = jnp.concatenate([probs, y * sel], axis=-1)


def _vmem_limit_bytes():
    # Generation-aware VMEM budget: ~half of physical, capped at 64 MiB
    # (v5e/v6e: 128 MiB physical -> 64 MiB; v7x: 64 MiB physical -> 32 MiB).
    try:
        cap = getattr(pltpu.get_tpu_info(), "vmem_capacity_bytes", 128 * 1024 * 1024)
        return int(min(cap // 2, 64 * 1024 * 1024))
    except Exception:
        return 32 * 1024 * 1024


def moe_forward(x, params, block_tokens=512):
    """x: (B, T, C) float32. Returns (output == zeros_like(x), gated_probs, exp0)."""
    b, t, c = x.shape
    e = params["w_gate"].shape[1]
    hid = params["w1"].shape[1]
    n = b * t

    ep = _round_up(e, 8)            # probs occupy lanes [0, ep)
    out_lanes = ep + c              # packed slab width (16 at reference shapes)

    # Token tile: multiple of 8 sublanes; large tiles amortize the ~0.35us/step grid
    # overhead.  For v7x, pick block_tokens <= n/2 so the "parallel" token axis still
    # shards across both TensorCores (nt >= 2); irrelevant on single-TC v5e/v6e.
    tm = max(8, (block_tokens // 8) * 8)
    tm = min(tm, _round_up(n, 8))
    nt = -(-n // tm)
    n_pad = nt * tm

    # x is only ever an MXU operand -> cast to bf16 in the wrapper (halves x traffic).
    x_flat = x.reshape(n, c).astype(jnp.bfloat16)
    if n_pad != n:
        x_flat = jnp.pad(x_flat, ((0, n_pad - n), (0, 0)))

    # Fused / padded bf16 weights; biases and all element-wise math stay f32.
    wg = jnp.pad(params["w_gate"], ((0, 0), (0, ep - e))).astype(jnp.bfloat16)
    w12 = jnp.concatenate([params["w1"], params["w2"]], axis=1).astype(jnp.bfloat16)
    b12 = jnp.concatenate([params["b1"], params["b2"]], axis=1).astype(jnp.float32)
    wp = params["wp"].astype(jnp.bfloat16)
    bp = params["bp"].astype(jnp.float32)

    kernel = functools.partial(_moe_kernel, num_experts=e)

    flops = 2 * n_pad * c * (ep + 2 * hid) + 2 * n_pad * hid * c
    transcendentals = n_pad * (ep + hid)
    bytes_accessed = (x_flat.size * 2
                      + (wg.size + w12.size + wp.size) * 2
                      + (b12.size + bp.size) * 4
                      + n_pad * out_lanes * 4)

    packed = pl.pallas_call(
        kernel,
        out_shape=jax.ShapeDtypeStruct((n_pad, out_lanes), jnp.float32),
        grid=(nt,),
        in_specs=[
            pl.BlockSpec((tm, c), lambda i: (i, 0)),          # x tile (pipelined)
            pl.BlockSpec((c, ep), lambda i: (0, 0)),          # gate weight (resident)
            pl.BlockSpec((c, 2 * hid), lambda i: (0, 0)),     # fused w1|w2 (resident)
            pl.BlockSpec((1, 2 * hid), lambda i: (0, 0)),     # fused b1|b2 (resident)
            pl.BlockSpec((hid, c), lambda i: (0, 0)),         # c_proj w (resident)
            pl.BlockSpec((1, c), lambda i: (0, 0)),           # c_proj b (resident)
        ],
        out_specs=pl.BlockSpec((tm, out_lanes), lambda i: (i, 0)),
        compiler_params=pltpu.CompilerParams(
            dimension_semantics=("parallel",),
            vmem_limit_bytes=_vmem_limit_bytes()),
        cost_estimate=pl.CostEstimate(flops=flops,
                                      transcendentals=transcendentals,
                                      bytes_accessed=bytes_accessed),
    )(x_flat, wg, w12, b12, wp, bp)

    probs = packed[:n, :e].reshape(b, t, e)
    exp0 = packed[:n, ep:ep + c].reshape(b, t, c)
    # MoE.forward never accumulates expert results into `output` (loop breaks after
    # expert 0), so the module's return value is exactly zeros_like(x).
    output = jnp.zeros_like(x)
    return output, probs, exp0


def moe_reference(x, params):
    """Pure-JAX reference of the compute the module actually performs (same bf16 casts)."""
    b, t, c = x.shape
    n = b * t
    e = params["w_gate"].shape[1]
    hid = params["w1"].shape[1]
    xb = x.reshape(n, c).astype(jnp.bfloat16)

    logits = jnp.dot(xb, params["w_gate"].astype(jnp.bfloat16),
                     preferred_element_type=jnp.float32)
    col = jnp.arange(e, dtype=jnp.int32)[None, :]
    m1 = jnp.max(logits, axis=-1, keepdims=True)
    idx1 = jnp.min(jnp.where(logits == m1, col, e), axis=-1, keepdims=True)
    masked = jnp.where(col == idx1, -jnp.inf, logits)
    m2 = jnp.max(masked, axis=-1, keepdims=True)
    idx2 = jnp.min(jnp.where(masked == m2, col, e), axis=-1, keepdims=True)
    top = (col == idx1) | (col == idx2)
    num = jnp.where(top, jnp.exp(logits - m1), 0.0)
    probs = num / jnp.sum(num, axis=-1, keepdims=True)

    sel = ((idx1 == 0) | (idx2 == 0)).astype(jnp.float32)
    w12 = jnp.concatenate([params["w1"], params["w2"]], axis=1).astype(jnp.bfloat16)
    b12 = jnp.concatenate([params["b1"], params["b2"]], axis=1)
    h12 = jnp.dot(xb, w12, preferred_element_type=jnp.float32) + b12
    h1, h2 = h12[:, :hid], h12[:, hid:]
    h = h1 * (h2 * jax.nn.sigmoid(h2))
    y = jnp.dot(h.astype(jnp.bfloat16), params["wp"].astype(jnp.bfloat16),
                preferred_element_type=jnp.float32) + params["bp"]
    return probs.reshape(b, t, e), (y * sel).reshape(b, t, c)


def init_params(key, n_embd, num_experts):
    hidden = 4 * n_embd
    ks = jax.random.split(key, 7)
    scale = 0.02
    return {
        # gate_linear: Linear(n_embd, num_experts, bias=False), stored (C, E)
        "w_gate": scale * jax.random.normal(ks[0], (n_embd, num_experts), jnp.float32),
        # expert 0 (ExpertMoESwiglu): ln_1, ln_2: C->4C ; c_proj: 4C->C (pre-transposed)
        "w1": scale * jax.random.normal(ks[1], (n_embd, hidden), jnp.float32),
        "b1": scale * jax.random.normal(ks[2], (1, hidden), jnp.float32),
        "w2": scale * jax.random.normal(ks[3], (n_embd, hidden), jnp.float32),
        "b2": scale * jax.random.normal(ks[4], (1, hidden), jnp.float32),
        "wp": scale * jax.random.normal(ks[5], (hidden, n_embd), jnp.float32),
        "bp": scale * jax.random.normal(ks[6], (1, n_embd), jnp.float32),
        # noise_weight is nn.Parameter(zeros) -> noise term is identically 0; omitted.
    }


if __name__ == "__main__":
    # Shapes from GPTConfig: batch=3, seq_len=7, n_embd=8, num_experts=5, k=2.
    B, T, C, E = 3, 7, 8, 5
    key = jax.random.PRNGKey(0)
    k_x, k_p = jax.random.split(key)
    x = jax.random.normal(k_x, (B, T, C), jnp.float32)
    params = init_params(k_p, C, E)

    probs_ref, exp0_ref = moe_reference(x, params)

    # Default (large) tile: single grid step at these tiny shapes,
    # plus a tm=8 run to exercise a multi-step token grid (21 tokens -> 3 tiles).
    for bt in (512, 8):
        out, probs, exp0 = moe_forward(x, params, block_tokens=bt)
        jax.block_until_ready((out, probs, exp0))

        # Module's return value is exactly zeros (expert loop breaks, never accumulates).
        assert out.shape == x.shape and bool(jnp.all(out == 0.0))

        # Gate probs: valid sparse top-2 distribution per token.
        row_sums = jnp.sum(probs, axis=-1)
        assert bool(jnp.all(jnp.abs(row_sums - 1.0) < 1e-3))
        assert bool(jnp.all(jnp.sum((probs > 0).astype(jnp.int32), axis=-1) == 2))

        # Pure-JAX reference of the executed compute.
        assert bool(jnp.allclose(probs, probs_ref, atol=2e-3, rtol=1e-3))
        assert bool(jnp.allclose(exp0, exp0_ref, atol=2e-3, rtol=5e-2))

    print("KERNEL_OK")
</pallas_src>

<mosaic_0001>
module attributes {stable_mosaic.version = 11 : i64} {
  func.func @_moe_kernel(%arg0: i32, %arg1: memref<24x8xbf16, #tpu.memory_space<vmem>>, %arg2: memref<8x8xbf16, #tpu.memory_space<vmem>>, %arg3: memref<8x64xbf16, #tpu.memory_space<vmem>>, %arg4: memref<1x64xf32, #tpu.memory_space<vmem>>, %arg5: memref<32x8xbf16, #tpu.memory_space<vmem>>, %arg6: memref<1x8xf32, #tpu.memory_space<vmem>>, %arg7: memref<24x16xf32, #tpu.memory_space<vmem>>) attributes {dimension_semantics = [#tpu.dimension_semantics<parallel>], iteration_bounds = array<i64: 1>, scalar_prefetch = 0 : i64, scratch_operands = 0 : i64, tpu.core_type = #tpu.core_type<tc>, window_params = [{transform_indices = @transform_0, window_bounds = array<i64: 24, 8>}, {pipeline_mode = #tpu.pipeline_mode<synchronous>, transform_indices = @transform_1, window_bounds = array<i64: 8, 8>}, {pipeline_mode = #tpu.pipeline_mode<synchronous>, transform_indices = @transform_2, window_bounds = array<i64: 8, 64>}, {pipeline_mode = #tpu.pipeline_mode<synchronous>, transform_indices = @transform_3, window_bounds = array<i64: 1, 64>}, {pipeline_mode = #tpu.pipeline_mode<synchronous>, transform_indices = @transform_4, window_bounds = array<i64: 32, 8>}, {pipeline_mode = #tpu.pipeline_mode<synchronous>, transform_indices = @transform_5, window_bounds = array<i64: 1, 8>}, {transform_indices = @transform_6, window_bounds = array<i64: 24, 16>}]} {
    %c0 = arith.constant 0 : index
    %c0_0 = arith.constant 0 : index
    %0 = vector.load %arg1[%c0, %c0_0] : memref<24x8xbf16, #tpu.memory_space<vmem>>, vector<24x8xbf16>
    %c0_1 = arith.constant 0 : index
    %c0_2 = arith.constant 0 : index
    %1 = vector.load %arg2[%c0_1, %c0_2] : memref<8x8xbf16, #tpu.memory_space<vmem>>, vector<8x8xbf16>
    %cst = arith.constant dense<0.000000e+00> : vector<24x8xf32>
    %2 = tpu.matmul %0, %1, %cst {dimension_numbers = #tpu.dot_dimension_numbers<[1], [0], [0], [1], [0, 0, 1, 1], [], []>} : vector<24x8xbf16>, vector<8x8xbf16>, vector<24x8xf32> -> vector<24x8xf32>
    %3 = tpu.iota {dimensions = array<i32: 1>} : vector<24x8xi32>
    %c5_i32 = arith.constant 5 : i32
    %4 = vector.broadcast %c5_i32 : i32 to vector<24x8xi32>
    %5 = arith.cmpi slt, %3, %4 : vector<24x8xi32>
    %cst_3 = arith.constant 0xFF800000 : f32
    %6 = vector.broadcast %cst_3 : f32 to vector<24x8xf32>
    %7 = arith.select %5, %2, %6 : vector<24x8xi1>, vector<24x8xf32>
    %cst_4 = arith.constant dense<0xFF800000> : vector<24xf32>
    %8 = vector.multi_reduction <maximumf>, %7, %cst_4 [1] : vector<24x8xf32> to vector<24xf32>
    %9 = vector.shape_cast %8 : vector<24xf32> to vector<24x1xf32>
    %10 = vector.broadcast %9 : vector<24x1xf32> to vector<24x8xf32>
    %11 = arith.cmpf oeq, %7, %10 : vector<24x8xf32>
    %c8_i32 = arith.constant 8 : i32
    %12 = vector.broadcast %c8_i32 : i32 to vector<24x8xi32>
    %13 = arith.select %11, %3, %12 : vector<24x8xi1>, vector<24x8xi32>
    %cst_5 = arith.constant dense<2147483647> : vector<24xi32>
    %14 = vector.multi_reduction <minsi>, %13, %cst_5 [1] : vector<24x8xi32> to vector<24xi32>
    %15 = vector.shape_cast %14 : vector<24xi32> to vector<24x1xi32>
    %16 = vector.broadcast %15 : vector<24x1xi32> to vector<24x8xi32>
    %17 = arith.cmpi eq, %3, %16 : vector<24x8xi32>
    %cst_6 = arith.constant 0xFF800000 : f32
    %18 = vector.broadcast %cst_6 : f32 to vector<24x8xf32>
    %19 = arith.select %17, %18, %7 : vector<24x8xi1>, vector<24x8xf32>
    %cst_7 = arith.constant dense<0xFF800000> : vector<24xf32>
    %20 = vector.multi_reduction <maximumf>, %19, %cst_7 [1] : vector<24x8xf32> to vector<24xf32>
    %21 = vector.shape_cast %20 : vector<24xf32> to vector<24x1xf32>
    %22 = vector.broadcast %21 : vector<24x1xf32> to vector<24x8xf32>
    %23 = arith.cmpf oeq, %19, %22 : vector<24x8xf32>
    %c8_i32_8 = arith.constant 8 : i32
    %24 = vector.broadcast %c8_i32_8 : i32 to vector<24x8xi32>
    %25 = arith.select %23, %3, %24 : vector<24x8xi1>, vector<24x8xi32>
    %cst_9 = arith.constant dense<2147483647> : vector<24xi32>
    %26 = vector.multi_reduction <minsi>, %25, %cst_9 [1] : vector<24x8xi32> to vector<24xi32>
    %27 = vector.shape_cast %26 : vector<24xi32> to vector<24x1xi32>
    %28 = vector.broadcast %15 : vector<24x1xi32> to vector<24x8xi32>
    %29 = arith.cmpi eq, %3, %28 : vector<24x8xi32>
    %30 = vector.broadcast %27 : vector<24x1xi32> to vector<24x8xi32>
    %31 = arith.cmpi eq, %3, %30 : vector<24x8xi32>
    %32 = arith.ori %29, %31 : vector<24x8xi1>
    %33 = vector.broadcast %9 : vector<24x1xf32> to vector<24x8xf32>
    %34 = arith.subf %7, %33 : vector<24x8xf32>
    %35 = math.exp %34 : vector<24x8xf32>
    %cst_10 = arith.constant 0.000000e+00 : f32
    %36 = vector.broadcast %cst_10 : f32 to vector<24x8xf32>
    %37 = arith.select %32, %35, %36 : vector<24x8xi1>, vector<24x8xf32>
    %cst_11 = arith.constant dense<0.000000e+00> : vector<24xf32>
    %38 = vector.multi_reduction <add>, %37, %cst_11 [1] : vector<24x8xf32> to vector<24xf32>
    %39 = vector.shape_cast %38 : vector<24xf32> to vector<24x1xf32>
    %40 = vector.broadcast %39 : vector<24x1xf32> to vector<24x8xf32>
    %41 = arith.divf %37, %40 : vector<24x8xf32>
    %c0_i32 = arith.constant 0 : i32
    %42 = vector.broadcast %c0_i32 : i32 to vector<24x1xi32>
    %43 = arith.cmpi eq, %15, %42 : vector<24x1xi32>
    %c0_i32_12 = arith.constant 0 : i32
    %44 = vector.broadcast %c0_i32_12 : i32 to vector<24x1xi32>
    %45 = arith.cmpi eq, %27, %44 : vector<24x1xi32>
    %46 = arith.ori %43, %45 : vector<24x1xi1>
    %47 = arith.extui %46 : vector<24x1xi1> to vector<24x1xi32>
    %48 = arith.sitofp %47 : vector<24x1xi32> to vector<24x1xf32>
    %c0_13 = arith.constant 0 : index
    %c0_14 = arith.constant 0 : index
    %49 = vector.load %arg3[%c0_13, %c0_14] : memref<8x64xbf16, #tpu.memory_space<vmem>>, vector<8x64xbf16>
    %cst_15 = arith.constant dense<0.000000e+00> : vector<24x64xf32>
    %50 = tpu.matmul %0, %49, %cst_15 {dimension_numbers = #tpu.dot_dimension_numbers<[1], [0], [0], [1], [0, 0, 1, 1], [], []>} : vector<24x8xbf16>, vector<8x64xbf16>, vector<24x64xf32> -> vector<24x64xf32>
    %c0_16 = arith.constant 0 : index
    %c0_17 = arith.constant 0 : index
    %51 = vector.load %arg4[%c0_16, %c0_17] : memref<1x64xf32, #tpu.memory_space<vmem>>, vector<1x64xf32>
    %52 = vector.broadcast %51 : vector<1x64xf32> to vector<24x64xf32>
    %53 = arith.addf %50, %52 : vector<24x64xf32>
    %54 = vector.extract_strided_slice %53 {offsets = [0, 0], sizes = [24, 32], strides = [1, 1]} : vector<24x64xf32> to vector<24x32xf32>
    %55 = vector.extract_strided_slice %53 {offsets = [0, 32], sizes = [24, 32], strides = [1, 1]} : vector<24x64xf32> to vector<24x32xf32>
    %cst_18 = arith.constant 5.000000e-01 : f32
    %56 = vector.broadcast %cst_18 : f32 to vector<24x32xf32>
    %57 = arith.mulf %56, %55 : vector<24x32xf32>
    %58 = math.tanh %57 : vector<24x32xf32>
    %cst_19 = arith.constant 5.000000e-01 : f32
    %59 = vector.broadcast %cst_19 : f32 to vector<24x32xf32>
    %60 = arith.mulf %59, %58 : vector<24x32xf32>
    %cst_20 = arith.constant 5.000000e-01 : f32
    %61 = vector.broadcast %cst_20 : f32 to vector<24x32xf32>
    %62 = arith.addf %60, %61 : vector<24x32xf32>
    %63 = arith.mulf %55, %62 : vector<24x32xf32>
    %64 = arith.mulf %54, %63 : vector<24x32xf32>
    %65 = arith.truncf %64 : vector<24x32xf32> to vector<24x32xbf16>
    %c0_21 = arith.constant 0 : index
    %c0_22 = arith.constant 0 : index
    %66 = vector.load %arg5[%c0_21, %c0_22] : memref<32x8xbf16, #tpu.memory_space<vmem>>, vector<32x8xbf16>
    %cst_23 = arith.constant dense<0.000000e+00> : vector<24x8xf32>
    %67 = tpu.matmul %65, %66, %cst_23 {dimension_numbers = #tpu.dot_dimension_numbers<[1], [0], [0], [1], [0, 0, 1, 1], [], []>} : vector<24x32xbf16>, vector<32x8xbf16>, vector<24x8xf32> -> vector<24x8xf32>
    %c0_24 = arith.constant 0 : index
    %c0_25 = arith.constant 0 : index
    %68 = vector.load %arg6[%c0_24, %c0_25] : memref<1x8xf32, #tpu.memory_space<vmem>>, vector<1x8xf32>
    %69 = vector.broadcast %68 : vector<1x8xf32> to vector<24x8xf32>
    %70 = arith.addf %67, %69 : vector<24x8xf32>
    %71 = vector.broadcast %48 : vector<24x1xf32> to vector<24x8xf32>
    %72 = arith.mulf %70, %71 : vector<24x8xf32>
    %73 = tpu.concatenate %41, %72 in 1 : vector<24x8xf32>, vector<24x8xf32> -> vector<24x16xf32>
    %c0_26 = arith.constant 0 : index
    %c0_27 = arith.constant 0 : index
    %74 = vector.load %arg7[%c0_26, %c0_27] : memref<24x16xf32, #tpu.memory_space<vmem>>, vector<24x16xf32>
    tpu.vector_store %arg7[%c0_26, %c0_27], %73 {strides = array<i32>} : memref<24x16xf32, #tpu.memory_space<vmem>>, vector<24x16xf32>,
    return
  }
  func.func @transform_0(%arg0: i32) -> (i32, i32) {
    %c0_i32 = arith.constant 0 : i32
    %c0_i32_0 = arith.constant 0 : i32
    return %arg0, %c0_i32 : i32, i32
  }
  func.func @transform_1(%arg0: i32) -> (i32, i32) {
    %c0_i32 = arith.constant 0 : i32
    %c0_i32_0 = arith.constant 0 : i32
    %c0_i32_1 = arith.constant 0 : i32
    return %c0_i32, %c0_i32_0 : i32, i32
  }
  func.func @transform_2(%arg0: i32) -> (i32, i32) {
    %c0_i32 = arith.constant 0 : i32
    %c0_i32_0 = arith.constant 0 : i32
    %c0_i32_1 = arith.constant 0 : i32
    return %c0_i32, %c0_i32_0 : i32, i32
  }
  func.func @transform_3(%arg0: i32) -> (i32, i32) {
    %c0_i32 = arith.constant 0 : i32
    %c0_i32_0 = arith.constant 0 : i32
    %c0_i32_1 = arith.constant 0 : i32
    return %c0_i32, %c0_i32_0 : i32, i32
  }
  func.func @transform_4(%arg0: i32) -> (i32, i32) {
    %c0_i32 = arith.constant 0 : i32
    %c0_i32_0 = arith.constant 0 : i32
    %c0_i32_1 = arith.constant 0 : i32
    return %c0_i32, %c0_i32_0 : i32, i32
  }
  func.func @transform_5(%arg0: i32) -> (i32, i32) {
    %c0_i32 = arith.constant 0 : i32
    %c0_i32_0 = arith.constant 0 : i32
    %c0_i32_1 = arith.constant 0 : i32
    return %c0_i32, %c0_i32_0 : i32, i32
  }
  func.func @transform_6(%arg0: i32) -> (i32, i32) {
    %c0_i32 = arith.constant 0 : i32
    %c0_i32_0 = arith.constant 0 : i32
    return %arg0, %c0_i32 : i32, i32
  }
}

</mosaic_0001>

<llo_original>
// kernel: tpu_custom_call.1
$region0: #{tpu_custom_call.1}
  #allocation0 [shape = 'u32[]', space=smem, size = 0x4, offset = 0x4, fixed_abs, tag = 'smem constant byte address 0x4 - core index']
  #allocation1 [shape = 'u32[144,128]{1,0:T(1,128)}', space=vmem, size = 0x12000, scoped, tag = 'internal scratch']
  %s0 = inlined_call_operand.vmem [shape: bf16[24,8], index: 0, kind: input, shape index: {}]
  %s1 = inlined_call_operand.vmem [shape: bf16[8,8], index: 1, kind: input, shape index: {}]
  %s2 = inlined_call_operand.vmem [shape: bf16[8,64], index: 2, kind: input, shape index: {}]
  %s3 = inlined_call_operand.vmem [shape: f32[1,64], index: 3, kind: input, shape index: {}]
  %s4 = inlined_call_operand.vmem [shape: bf16[32,8], index: 4, kind: input, shape index: {}]
  %s5 = inlined_call_operand.vmem [shape: f32[1,8], index: 5, kind: input, shape index: {}]
  %s6 = inlined_call_operand.vmem [shape: f32[24,16], index: 6, kind: output, shape index: {}]
  %s7 = sld [smem:[#allocation0]]
  $region34: #{tpu_custom_call.1} parent=0
    _
  %s9 = ssub.s32 1, %s7
  %s10 = scalar_select 0, %s9, %s7
  // Predicated region
  $region2: #{tpu_custom_call.1} parent=0 // pred_check
    _
  $region3: #{tpu_custom_call.1} parent=0 // pred_check_branch
    %12 = sbr.rel (0) target = $region5
  $region4: #{tpu_custom_call.1} parent=0 // pred_region
    _
  $region5: #{tpu_custom_call.1} parent=0 // pred_fallthru
    _
  // Predicated region
  $region6: #{tpu_custom_call.1} parent=0 // pred_check
    _
  $region7: #{tpu_custom_call.1} parent=0 // pred_check_branch
    %14 = sbr.rel (0) target = $region9
  $region8: #{tpu_custom_call.1} parent=0 // pred_region
    _
  $region9: #{tpu_custom_call.1} parent=0 // pred_fallthru
    _
  // Predicated region
  $region10: #{tpu_custom_call.1} parent=0 // pred_check
    _
  $region11: #{tpu_custom_call.1} parent=0 // pred_check_branch
    %16 = sbr.rel (0) target = $region13
  $region12: #{tpu_custom_call.1} parent=0 // pred_region
    _
  $region13: #{tpu_custom_call.1} parent=0 // pred_fallthru
    _
  // Predicated region
  $region14: #{tpu_custom_call.1} parent=0 // pred_check
    _
  $region15: #{tpu_custom_call.1} parent=0 // pred_check_branch
    %18 = sbr.rel (0) target = $region17
  $region16: #{tpu_custom_call.1} parent=0 // pred_region
    _
  $region17: #{tpu_custom_call.1} parent=0 // pred_fallthru
    _
  // Predicated region
  $region18: #{tpu_custom_call.1} parent=0 // pred_check
    _
  $region19: #{tpu_custom_call.1} parent=0 // pred_check_branch
    %20 = sbr.rel (0) target = $region21
  $region20: #{tpu_custom_call.1} parent=0 // pred_region
    _
  $region21: #{tpu_custom_call.1} parent=0 // pred_fallthru
    _
  // Predicated region
  $region22: #{tpu_custom_call.1} parent=0 // pred_check
    _
  $region23: #{tpu_custom_call.1} parent=0 // pred_check_branch
    %22 = sbr.rel (0) target = $region25
  $region24: #{tpu_custom_call.1} parent=0 // pred_region
    _
  $region25: #{tpu_custom_call.1} parent=0 // pred_fallthru
    _
  %v24 = vld [vmem:[%s0] sm:$0xf]
  %v25 = vld [vmem:[%s0 + $0x4] sm:$0xf]
  %v26 = vld [vmem:[%s0 + $0x8] sm:$0xf]
  %v27 = vld [vmem:[%s1] sm:$0xf]
  %v31 = vunpack.c.l.b16 %v24
  %v32 = vunpack.c.l.b16 %v25
  %v33 = vunpack.c.l.b16 %v26
  %v34 = vpack.c.b16 %v32, %v31
  %v35 = vpack.c.b16 %v33, %v33
  %vm36 = vcmask 64512
  %v38 = vsel %vm36, %v34, 0
  %v41 = vsel %vm36, %v35, 0
  %vm43 = vcmask 1043456
  %v45 = vsel %vm43, %v27, 0
  %47 = vmatprep.subr.bf16.mxu0 0
  %48 = vmatpush1.bf16.msra.mxu0 0
  %49 = vmatprep.subr.bf16.mxu0 0
  %50 = vmatpush1.bf16.msra.mxu0 0
  %51 = vmatprep.subr.bf16.mxu0 0
  %52 = vmatpush1.bf16.msra.mxu0 0
  %53 = vmatprep.subr.bf16.mxu0 0
  %54 = vmatpush1.bf16.msra.mxu0 0
  %55 = vmatprep.subr.bf16.mxu0 0
  %56 = vmatpush1.bf16.msra.mxu0 0
  %57 = vmatprep.subr.bf16.mxu0 0
  %58 = vmatpush1.bf16.msra.mxu0 0
  %59 = vmatprep.subr.bf16.mxu0 0
  %60 = vmatpush1.bf16.msra.mxu0 0
  %61 = vmatprep.subr.bf16.mxu0 0
  %62 = vmatpush1.bf16.msra.mxu0 %v45
  %63 = vmatprep.subr.bf16.mxu0 0
  %64 = vmatpush2.bf16.msra.mxu0 0
  %65 = vmatprep.subr.bf16.mxu0 0
  %66 = vmatpush2.bf16.msra.mxu0 0
  %67 = vmatprep.subr.bf16.mxu0 0
  %68 = vmatpush2.bf16.msra.mxu0 0
  %69 = vmatprep.subr.bf16.mxu0 0
  %70 = vmatpush2.bf16.msra.mxu0 0
  %71 = vmatprep.subr.bf16.mxu0 0
  %72 = vmatpush2.bf16.msra.mxu0 0
  %73 = vmatprep.subr.bf16.mxu0 0
  %74 = vmatpush2.bf16.msra.mxu0 0
  %75 = vmatprep.subr.bf16.mxu0 0
  %76 = vmatpush2.bf16.msra.mxu0 0
  %77 = vmatprep.subr.bf16.mxu0 0
  %78 = vmatpush2.bf16.msra.mxu0 0
  %79 = vmatprep.mubr.bf16.mxu0 0
  %80 = vmatmul.mubr.bf16.gmra.mxu0 %v38
  %v81 = vpop.f32.mrf.mxu0
  %v82 = vadd.f32 0.0, %v81
  %v83 = vpop.f32.mrf.mxu0
  %v84 = vpop.f32.mrf.mxu0
  %v85 = vadd.f32 0.0, %v84
  %v86 = vpop.f32.mrf.mxu0
  %87 = vmatprep.mubr.bf16.mxu0 0
  %88 = vmatmul.mubr.bf16.gmra.mxu0 %v41
  %v89 = vpop.f32.mrf.mxu0
  %v90 = vadd.f32 0.0, %v89
  %v91 = vpop.f32.mrf.mxu0
  %v92 = vpop.f32.mrf.mxu0
  %v93 = vpop.f32.mrf.mxu0
  %94 = vdwg.mxu0
  %v95 = vlaneseq
  %v96 = vand.u32 %v95, 127
  %vm97 = vcmp.lt.s32.totalorder %v96, 5
  %v98 = vsel %vm97, %v82, -inf
  %v99 = vsel %vm97, %v85, -inf
  %v100 = vsel %vm97, %v90, -inf
  %v101 = vsel %vm36, %v98, -inf
  %102 = vmax.xlane.f32.xlu0 %v101
  %v103 = vpop.xlane.xlu0 %102
  %v104 = vsel %vm36, %v99, -inf
  %105 = vmax.xlane.f32.xlu0 %v104
  %v106 = vpop.xlane.xlu0 %105
  %v107 = vsel %vm36, %v100, -inf
  %108 = vmax.xlane.f32.xlu0 %v107
  %v109 = vpop.xlane.xlu0 %108
  %vm110 = vcmp.eq.f32.partialorder %v98, %v103
  %vm111 = vcmp.eq.f32.partialorder %v99, %v106
  %vm112 = vcmp.eq.f32.partialorder %v100, %v109
  %v113 = vsel %vm110, %v96, 8
  %v114 = vsel %vm111, %v96, 8
  %v115 = vsel %vm112, %v96, 8
  %v116 = vsel %vm36, %v113, 2147483647
  %v117 = vand.u32 %v116, 65535
  %v118 = vshra.s32 %v116, 16
  %v119 = vcvt.s32.f32 %v117
  %v120 = vcvt.s32.f32 %v118
  %121 = vmin.xlane.f32.xlu0 %v120
  %v122 = vpop.xlane.xlu0 %121
  %vm123 = vcmp.eq.f32.partialorder %v120, %v122
  %v124 = vsel %vm123, %v119, inf
  %125 = vmin.xlane.f32.xlu0 %v124
  %v126 = vpop.xlane.xlu0 %125
  %v127 = vcvt.f32.s32 %v126
  %v128 = vcvt.f32.s32 %v122
  %v129 = vshll.u32 %v128, 16
  %v130 = vadd.s32 %v129, %v127
  %v131 = vsel %vm36, %v114, 2147483647
  %v132 = vand.u32 %v131, 65535
  %v133 = vshra.s32 %v131, 16
  %v134 = vcvt.s32.f32 %v132
  %v135 = vcvt.s32.f32 %v133
  %136 = vmin.xlane.f32.xlu0 %v135
  %v137 = vpop.xlane.xlu0 %136
  %vm138 = vcmp.eq.f32.partialorder %v135, %v137
  %v139 = vsel %vm138, %v134, inf
  %140 = vmin.xlane.f32.xlu0 %v139
  %v141 = vpop.xlane.xlu0 %140
  %v142 = vcvt.f32.s32 %v141
  %v143 = vcvt.f32.s32 %v137
  %v144 = vshll.u32 %v143, 16
  %v145 = vadd.s32 %v144, %v142
  %v146 = vsel %vm36, %v115, 2147483647
  %v147 = vand.u32 %v146, 65535
  %v148 = vshra.s32 %v146, 16
  %v149 = vcvt.s32.f32 %v147
  %v150 = vcvt.s32.f32 %v148
  %151 = vmin.xlane.f32.xlu0 %v150
  %v152 = vpop.xlane.xlu0 %151
  %vm153 = vcmp.eq.f32.partialorder %v150, %v152
  %v154 = vsel %vm153, %v149, inf
  %155 = vmin.xlane.f32.xlu0 %v154
  %v156 = vpop.xlane.xlu0 %155
  %v157 = vcvt.f32.s32 %v156
  %v158 = vcvt.f32.s32 %v152
  %v159 = vshll.u32 %v158, 16
  %v160 = vadd.s32 %v159, %v157
  %vm161 = vcmp.eq.s32.totalorder %v96, %v130
  %vm162 = vcmp.eq.s32.totalorder %v96, %v145
  %vm163 = vcmp.eq.s32.totalorder %v96, %v160
  %v164 = vsel %vm161, -inf, %v98
  %v165 = vsel %vm162, -inf, %v99
  %v166 = vsel %vm163, -inf, %v100
  %v167 = vsel %vm36, %v164, -inf
  %168 = vmax.xlane.f32.xlu0 %v167
  %v169 = vpop.xlane.xlu0 %168
  %v170 = vsel %vm36, %v165, -inf
  %171 = vmax.xlane.f32.xlu0 %v170
  %v172 = vpop.xlane.xlu0 %171
  %v173 = vsel %vm36, %v166, -inf
  %174 = vmax.xlane.f32.xlu0 %v173
  %v175 = vpop.xlane.xlu0 %174
  %vm176 = vcmp.eq.f32.partialorder %v164, %v169
  %vm177 = vcmp.eq.f32.partialorder %v165, %v172
  %vm178 = vcmp.eq.f32.partialorder %v166, %v175
  %v179 = vsel %vm176, %v96, 8
  %v180 = vsel %vm177, %v96, 8
  %v181 = vsel %vm178, %v96, 8
  %v182 = vsel %vm36, %v179, 2147483647
  %v183 = vand.u32 %v182, 65535
  %v184 = vshra.s32 %v182, 16
  %v185 = vcvt.s32.f32 %v183
  %v186 = vcvt.s32.f32 %v184
  %187 = vmin.xlane.f32.xlu0 %v186
  %v188 = vpop.xlane.xlu0 %187
  %vm189 = vcmp.eq.f32.partialorder %v186, %v188
  %v190 = vsel %vm189, %v185, inf
  %191 = vmin.xlane.f32.xlu0 %v190
  %v192 = vpop.xlane.xlu0 %191
  %v193 = vcvt.f32.s32 %v192
  %v194 = vcvt.f32.s32 %v188
  %v195 = vshll.u32 %v194, 16
  %v196 = vadd.s32 %v195, %v193
  %v197 = vsel %vm36, %v180, 2147483647
  %v198 = vand.u32 %v197, 65535
  %v199 = vshra.s32 %v197, 16
  %v200 = vcvt.s32.f32 %v198
  %v201 = vcvt.s32.f32 %v199
  %202 = vmin.xlane.f32.xlu0 %v201
  %v203 = vpop.xlane.xlu0 %202
  %vm204 = vcmp.eq.f32.partialorder %v201, %v203
  %v205 = vsel %vm204, %v200, inf
  %206 = vmin.xlane.f32.xlu0 %v205
  %v207 = vpop.xlane.xlu0 %206
  %v208 = vcvt.f32.s32 %v207
  %v209 = vcvt.f32.s32 %v203
  %v210 = vshll.u32 %v209, 16
  %v211 = vadd.s32 %v210, %v208
  %v212 = vsel %vm36, %v181, 2147483647
  %v213 = vand.u32 %v212, 65535
  %v214 = vshra.s32 %v212, 16
  %v215 = vcvt.s32.f32 %v213
  %v216 = vcvt.s32.f32 %v214
  %217 = vmin.xlane.f32.xlu0 %v216
  %v218 = vpop.xlane.xlu0 %217
  %vm219 = vcmp.eq.f32.partialorder %v216, %v218
  %v220 = vsel %vm219, %v215, inf
  %221 = vmin.xlane.f32.xlu0 %v220
  %v222 = vpop.xlane.xlu0 %221
  %v223 = vcvt.f32.s32 %v222
  %v224 = vcvt.f32.s32 %v218
  %v225 = vshll.u32 %v224, 16
  %v226 = vadd.s32 %v225, %v223
  %vm227 = vcmp.eq.s32.totalorder %v96, %v196
  %vm228 = vcmp.eq.s32.totalorder %v96, %v211
  %vm229 = vcmp.eq.s32.totalorder %v96, %v226
  %vm230 = vmor %vm161, %vm227
  %vm231 = vmor %vm162, %vm228
  %vm232 = vmor %vm163, %vm229
  %v233 = vsub.f32 %v98, %v103
  %v234 = vsub.f32 %v99, %v106
  %v235 = vsub.f32 %v100, %v109
  %v236 = vmul.f32 %v233, 1.442695
  %v237 = vpow.pop %v236
  %v238 = vmul.f32 %v234, 1.442695
  %v239 = vpow.pop %v238
  %v240 = vmul.f32 %v235, 1.442695
  %v241 = vpow.pop %v240
  %v242 = vsel %vm230, %v237, 0.0
  %v243 = vsel %vm231, %v239, 0.0
  %v244 = vsel %vm232, %v241, 0.0
  %v245 = vsel %vm36, %v242, 0.0
  %246 = vadd.xlane.f32.xlu0 %v245
  %v247 = vpop.xlane.xlu0 %246
  %v248 = vsel %vm36, %v243, 0.0
  %249 = vadd.xlane.f32.xlu0 %v248
  %v250 = vpop.xlane.xlu0 %249
  %v251 = vsel %vm36, %v244, 0.0
  %252 = vadd.xlane.f32.xlu0 %v251
  %v253 = vpop.xlane.xlu0 %252
  %v254 = vrcp.pop %v247
  %v255 = vmul.f32 %v242, %v254
  %v256 = vrcp.pop %v250
  %v257 = vmul.f32 %v243, %v256
  %v258 = vrcp.pop %v253
  %v259 = vmul.f32 %v244, %v258
  %vm260 = vcmp.eq.s32.totalorder %v130, 0
  %vm261 = vcmp.eq.s32.totalorder %v145, 0
  %vm262 = vcmp.eq.s32.totalorder %v160, 0
  %vm263 = vcmp.eq.s32.totalorder %v196, 0
  %vm264 = vcmp.eq.s32.totalorder %v211, 0
  %vm265 = vcmp.eq.s32.totalorder %v226, 0
  %vm266 = vmor %vm260, %vm263
  %vm267 = vmor %vm261, %vm264
  %vm268 = vmor %vm262, %vm265
  %v269 = vsel %vm266, 1, 0
  %v270 = vsel %vm267, 1, 0
  %v271 = vsel %vm268, 1, 0
  %v272 = vcvt.s32.f32 %v269
  %v273 = vcvt.s32.f32 %v270
  %v274 = vcvt.s32.f32 %v271
  %v275 = vld [vmem:[%s2] sm:$0xf]
  %v276 = vld [vmem:[%s3] sm:$0x1]
  %v278 = vlaneseq
  %v279 = vshrl.u32 %v278, 7
  %v280 = vsub.s32 0, %v279
  %v281 = vrot.slane %v276, %v280
  %v284 = vsel %vm43, %v275, 0
  %286 = vmatprep.subr.bf16.mxu0 0
  %287 = vmatpush1.bf16.msra.mxu0 0
  %288 = vmatprep.subr.bf16.mxu0 0
  %289 = vmatpush1.bf16.msra.mxu0 0
  %290 = vmatprep.subr.bf16.mxu0 0
  %291 = vmatpush1.bf16.msra.mxu0 0
  %292 = vmatprep.subr.bf16.mxu0 0
  %293 = vmatpush1.bf16.msra.mxu0 0
  %294 = vmatprep.subr.bf16.mxu0 0
  %295 = vmatpush1.bf16.msra.mxu0 0
  %296 = vmatprep.subr.bf16.mxu0 0
  %297 = vmatpush1.bf16.msra.mxu0 0
  %298 = vmatprep.subr.bf16.mxu0 0
  %299 = vmatpush1.bf16.msra.mxu0 0
  %300 = vmatprep.subr.bf16.mxu0 0
  %301 = vmatpush1.bf16.msra.mxu0 %v284
  %302 = vmatprep.subr.bf16.mxu0 0
  %303 = vmatpush2.bf16.msra.mxu0 0
  %304 = vmatprep.subr.bf16.mxu0 0
  %305 = vmatpush2.bf16.msra.mxu0 0
  %306 = vmatprep.subr.bf16.mxu0 0
  %307 = vmatpush2.bf16.msra.mxu0 0
  %308 = vmatprep.subr.bf16.mxu0 0
  %309 = vmatpush2.bf16.msra.mxu0 0
  %310 = vmatprep.subr.bf16.mxu0 0
  %311 = vmatpush2.bf16.msra.mxu0 0
  %312 = vmatprep.subr.bf16.mxu0 0
  %313 = vmatpush2.bf16.msra.mxu0 0
  %314 = vmatprep.subr.bf16.mxu0 0
  %315 = vmatpush2.bf16.msra.mxu0 0
  %316 = vmatprep.subr.bf16.mxu0 0
  %317 = vmatpush2.bf16.msra.mxu0 0
  %318 = vmatprep.mubr.bf16.mxu0 0
  %319 = vmatmul.mubr.bf16.gmra.mxu0 %v38
  %v320 = vpop.f32.mrf.mxu0
  %v321 = vadd.f32 %v281, %v320
  %v322 = vpop.f32.mrf.mxu0
  %v323 = vpop.f32.mrf.mxu0
  %v324 = vadd.f32 %v281, %v323
  %v325 = vpop.f32.mrf.mxu0
  %326 = vmatprep.mubr.bf16.mxu0 0
  %327 = vmatmul.mubr.bf16.gmra.mxu0 %v41
  %v328 = vpop.f32.mrf.mxu0
  %v329 = vadd.f32 %v281, %v328
  %v330 = vpop.f32.mrf.mxu0
  %v331 = vpop.f32.mrf.mxu0
  %v332 = vpop.f32.mrf.mxu0
  %333 = vdwg.mxu0
  %v334 = vmul.f32 %v321, 0.5
  %v335 = vmul.f32 %v324, 0.5
  %v336 = vmul.f32 %v329, 0.5
  %v337 = vtanh.pop %v334
  %v338 = vtanh.pop %v335
  %v339 = vtanh.pop %v336
  %v340 = vmul.f32 %v337, 0.5
  %v341 = vmul.f32 %v338, 0.5
  %v342 = vmul.f32 %v339, 0.5
  %v343 = vadd.f32 %v340, 0.5
  %v344 = vadd.f32 %v341, 0.5
  %v345 = vadd.f32 %v342, 0.5
  %v346 = vmul.f32 %v321, %v343
  %v347 = vmul.f32 %v324, %v344
  %v348 = vmul.f32 %v329, %v345
  %352 = vrot.lane.b32.xlu0 %v346, 96
  %v353 = vpop.permute.xlu0 %352
  %354 = vrot.lane.b32.xlu0 %v347, 96
  %v355 = vpop.permute.xlu0 %354
  %356 = vrot.lane.b32.xlu0 %v348, 96
  %v357 = vpop.permute.xlu0 %356
  %v361 = vmul.f32 %v321, %v353
  %v362 = vmul.f32 %v324, %v355
  %v363 = vmul.f32 %v329, %v357
  %v364 = vpack.c.bf16 %v362, %v361
  %v365 = vpack.c.bf16 %v363, %v363
  %v366 = vld [vmem:[%s4] sm:$0xf]
  %v367 = vld [vmem:[%s4 + $0x4] sm:$0xf]
  %v368 = vld [vmem:[%s4 + $0x8] sm:$0xf]
  %v369 = vld [vmem:[%s4 + $0xc] sm:$0xf]
  %v370 = vld [vmem:[%s5] sm:$0x1]
  %v372 = vlaneseq
  %v373 = vshrl.u32 %v372, 7
  %v374 = vsub.s32 0, %v373
  %v375 = vrot.slane %v370, %v374
  %v381 = vunpack.c.l.b16 %v366
  %v382 = vunpack.c.l.b16 %v367
  %v383 = vunpack.c.l.b16 %v368
  %v384 = vunpack.c.l.b16 %v369
  %v385 = vpack.c.b16 %v382, %v381
  %v386 = vpack.c.b16 %v384, %v383
  %vm389 = vcmask 261120
  %v391 = vsel %vm389, %v364, 0
  %v394 = vsel %vm389, %v365, 0
  %396 = vmatprep.subr.bf16.mxu0 0
  %397 = vmatpush1.bf16.msra.mxu0 0
  %398 = vmatprep.subr.bf16.mxu0 0
  %399 = vmatpush1.bf16.msra.mxu0 0
  %400 = vmatprep.subr.bf16.mxu0 0
  %401 = vmatpush1.bf16.msra.mxu0 0
  %402 = vmatprep.subr.bf16.mxu0 0
  %403 = vmatpush1.bf16.msra.mxu0 0
  %404 = vmatprep.subr.bf16.mxu0 0
  %405 = vmatpush1.bf16.msra.mxu0 0
  %406 = vmatprep.subr.bf16.mxu0 0
  %407 = vmatpush1.bf16.msra.mxu0 0
  %408 = vmatprep.subr.bf16.mxu0 0
  %409 = vmatpush1.bf16.msra.mxu0 %v386
  %410 = vmatprep.subr.bf16.mxu0 0
  %411 = vmatpush1.bf16.msra.mxu0 %v385
  %412 = vmatprep.subr.bf16.mxu0 0
  %413 = vmatpush2.bf16.msra.mxu0 0
  %414 = vmatprep.subr.bf16.mxu0 0
  %415 = vmatpush2.bf16.msra.mxu0 0
  %416 = vmatprep.subr.bf16.mxu0 0
  %417 = vmatpush2.bf16.msra.mxu0 0
  %418 = vmatprep.subr.bf16.mxu0 0
  %419 = vmatpush2.bf16.msra.mxu0 0
  %420 = vmatprep.subr.bf16.mxu0 0
  %421 = vmatpush2.bf16.msra.mxu0 0
  %422 = vmatprep.subr.bf16.mxu0 0
  %423 = vmatpush2.bf16.msra.mxu0 0
  %424 = vmatprep.subr.bf16.mxu0 0
  %425 = vmatpush2.bf16.msra.mxu0 0
  %426 = vmatprep.subr.bf16.mxu0 0
  %427 = vmatpush2.bf16.msra.mxu0 0
  %428 = vmatprep.mubr.bf16.mxu0 0
  %429 = vmatmul.mubr.bf16.gmra.mxu0 %v391
  %v430 = vpop.f32.mrf.mxu0
  %v431 = vadd.f32 %v375, %v430
  %v432 = vpop.f32.mrf.mxu0
  %v433 = vpop.f32.mrf.mxu0
  %v434 = vadd.f32 %v375, %v433
  %v435 = vpop.f32.mrf.mxu0
  %436 = vmatprep.mubr.bf16.mxu0 0
  %437 = vmatmul.mubr.bf16.gmra.mxu0 %v394
  %v438 = vpop.f32.mrf.mxu0
  %v439 = vadd.f32 %v375, %v438
  %v440 = vpop.f32.mrf.mxu0
  %v441 = vpop.f32.mrf.mxu0
  %v442 = vpop.f32.mrf.mxu0
  %443 = vdwg.mxu0
  %v444 = vmul.f32 %v431, %v272
  %v445 = vmul.f32 %v434, %v273
  %v446 = vmul.f32 %v439, %v274
  %450 = vrot.lane.b32.xlu0 %v444, 8
  %v451 = vpop.permute.xlu0 %450
  %452 = vrot.lane.b32.xlu0 %v445, 8
  %v453 = vpop.permute.xlu0 %452
  %454 = vrot.lane.b32.xlu0 %v446, 8
  %v455 = vpop.permute.xlu0 %454
  %v459 = vsel %vm36, %v255, %v451
  %v460 = vsel %vm36, %v257, %v453
  %v461 = vsel %vm36, %v259, %v455
  %vm462 = vcmask 130048
  %463 = vst.msk [vmem:[%s6] sm:$0xff] %vm462, %v459
  %464 = vst.msk [vmem:[%s6 + $0x8] sm:$0xff] %vm462, %v460
  %465 = vst.msk [vmem:[%s6 + $0x10] sm:$0xff] %vm462, %v461
  // Predicated region
  $region26: #{tpu_custom_call.1} parent=0 // pred_check
    _
  $region27: #{tpu_custom_call.1} parent=0 // pred_check_branch
    %467 = sbr.rel (0) target = $region29
  $region28: #{tpu_custom_call.1} parent=0 // pred_region
    _
  $region29: #{tpu_custom_call.1} parent=0 // pred_fallthru
    _
  // Predicated region
  $region30: #{tpu_custom_call.1} parent=0 // pred_check
    _
  $region31: #{tpu_custom_call.1} parent=0 // pred_check_branch
    %469 = sbr.rel (0) target = $region33
  $region32: #{tpu_custom_call.1} parent=0 // pred_region
    _
  $region33: #{tpu_custom_call.1} parent=0 // pred_fallthru
    _

</llo_original>
